<compile_context>
chip_gen: v5e
topology: v5e:2x2
jax: 0.10.0
libtpu: 0.0.40
codegen_flags: <defaults>
</compile_context>

<pallas_src>
import math
import numpy as np
import jax
import jax.numpy as jnp
from jax import lax
from jax.experimental import pallas as pl
from jax.experimental.pallas import tpu as pltpu

# ---- problem sizes (small, consistent with the module) ----
B = 2          # batch
N = 8          # sequence length
E = 32         # emb_size
H = 4          # num_heads
D = E // H     # head dim
DROPOUT = 0.1  # nn.Dropout prob  # TODO(synk): training-mode dropout not implemented (eval/identity only)


def mha_kernel(x_ref, wqkv_ref, bqkv_ref, wp_ref, bp_ref, o_ref):
    # x_ref block: (B*N, E) rows (single grid step)
    rows = x_ref.shape[0]
    bb = rows // N

    # Fused Q/K/V projection: one bf16 MXU push, f32 accumulation.
    # 1/sqrt(E) is already folded into the Q columns of wqkv/bqkv host-side.
    x_bf = x_ref[...].astype(jnp.bfloat16)
    qkv = jnp.dot(x_bf, wqkv_ref[...], preferred_element_type=jnp.float32)
    qkv = qkv + bqkv_ref[...]                                   # (rows, 3E) f32

    bp = bp_ref[...]                                            # (1, E) f32

    for b in range(bb):
        r0 = b * N
        qkv_b = qkv[r0:r0 + N, :]                               # (N, 3E) f32
        acc = None                                              # (N, E) f32 register value
        for h in range(H):
            c0 = h * D
            # Each (b, h) slice is taken exactly once (lane selects, no re-slicing).
            q_h = qkv_b[:, c0:c0 + D].astype(jnp.bfloat16)          # (N, D)
            k_h = qkv_b[:, E + c0:E + c0 + D].astype(jnp.bfloat16)  # (N, D)
            v_h = qkv_b[:, 2 * E + c0:2 * E + c0 + D].astype(jnp.bfloat16)

            # energy = einsum('qd,kd->qk') without materializing k_h.T
            energy = lax.dot_general(
                q_h, k_h, (((1,), (1,)), ((), ())),
                preferred_element_type=jnp.float32)             # (N, N) f32

            # numerically-stable softmax in f32; reciprocal runs on the EUP
            m = jnp.max(energy, axis=-1, keepdims=True)
            p = jnp.exp(energy - m)
            inv_l = pl.reciprocal(jnp.sum(p, axis=-1, keepdims=True),
                                  approx=True)
            att = (p * inv_l).astype(jnp.bfloat16)              # (N, N) bf16

            # head_out = att @ v_h, then fold the output projection directly:
            # contrib = head_out @ Wp^T[hD:(h+1)D, :]  (sublane-aligned ref view)
            head_out = jnp.dot(att, v_h,
                               preferred_element_type=jnp.float32)  # (N, D) f32
            contrib = jnp.dot(head_out.astype(jnp.bfloat16),
                              wp_ref[c0:c0 + D, :],
                              preferred_element_type=jnp.float32)   # (N, E) f32
            acc = contrib if acc is None else acc + contrib

        # Single lane-full store per batch row-block (no scratch round trip).
        o_ref[r0:r0 + N, :] = (acc + bp).astype(o_ref.dtype)


def prepare_mha_params(params, emb_size=E):
    """One-time (off the hot path) weight prep: fuse Q/K/V, pre-transpose,
    fold the 1/sqrt(emb_size) scale into the Q columns, cast MXU weights to
    bf16.  Biases stay f32 (added after f32 accumulation)."""
    wq, bq, wk, bk, wv, bv, wp, bp = params
    inv_scale = 1.0 / math.sqrt(emb_size)
    wqkv_t = jnp.concatenate([wq.T * inv_scale, wk.T, wv.T],
                             axis=1).astype(jnp.bfloat16)       # (E, 3E) bf16
    bqkv = jnp.concatenate([bq * inv_scale, bk, bv], axis=1)    # (1, 3E) f32
    wp_t = wp.T.astype(jnp.bfloat16)                            # (E, E)  bf16
    return wqkv_t, bqkv, wp_t, bp


def multi_head_attention(x, prepared_params):
    wqkv_t, bqkv, wp_t, bp = prepared_params
    Bx, Nx, Ex = x.shape
    rows = Bx * Nx

    # Fold batch into rows; lane (E) dimension untouched.
    x2 = x.reshape(rows, Ex)

    out2 = pl.pallas_call(
        mha_kernel,
        out_shape=jax.ShapeDtypeStruct((rows, Ex), x.dtype),
        grid_spec=pltpu.PrefetchScalarGridSpec(
            num_scalar_prefetch=0,
            grid=(1,),                                          # single step: tiny, overhead-bound
            in_specs=[
                pl.BlockSpec((rows, Ex), lambda g: (0, 0)),       # x rows
                pl.BlockSpec((Ex, 3 * Ex), lambda g: (0, 0)),     # fused Wqkv^T (bf16)
                pl.BlockSpec((1, 3 * Ex), lambda g: (0, 0)),      # fused bias (f32)
                pl.BlockSpec((Ex, Ex), lambda g: (0, 0)),         # Wp^T (bf16)
                pl.BlockSpec((1, Ex), lambda g: (0, 0)),          # bp (f32)
            ],
            out_specs=pl.BlockSpec((rows, Ex), lambda g: (0, 0)),
        ),
        compiler_params=pltpu.CompilerParams(
            dimension_semantics=("arbitrary",)),
    )(x2, wqkv_t, bqkv, wp_t, bp)

    return out2.reshape(Bx, Nx, Ex)


def reference(x, params):
    wq, bq, wk, bk, wv, bv, wp, bp = params
    q = x @ wq.T + bq
    k = x @ wk.T + bk
    v = x @ wv.T + bv
    def split(t):  # 'b n (h d) -> b h n d'
        return t.reshape(B, N, H, D).transpose(0, 2, 1, 3)
    qh, kh, vh = split(q), split(k), split(v)
    energy = jnp.einsum('bhqd,bhkd->bhqk', qh, kh)
    att = jax.nn.softmax(energy / (E ** 0.5), axis=-1)
    out = jnp.einsum('bhal,bhlv->bhav', att, vh)
    out = out.transpose(0, 2, 1, 3).reshape(B, N, E)       # 'b h n d -> b n (h d)'
    return out @ wp.T + bp


if __name__ == "__main__":
    key = jax.random.PRNGKey(0)
    kx, kq, kk, kv, kp, kbq, kbk, kbv, kbp = jax.random.split(key, 9)

    x = jax.random.normal(kx, (B, N, E), dtype=jnp.float32)

    def init_w(k):
        return jax.random.normal(k, (E, E), dtype=jnp.float32) * 0.05

    def init_b(k):
        return jax.random.normal(k, (1, E), dtype=jnp.float32) * 0.05

    params = (init_w(kq), init_b(kbq),
              init_w(kk), init_b(kbk),
              init_w(kv), init_b(kbv),
              init_w(kp), init_b(kbp))

    # Hoisted one-time weight prep (not part of the per-call hot path).
    prepared = jax.block_until_ready(
        jax.tree_util.tree_map(jnp.asarray, prepare_mha_params(params)))

    out = multi_head_attention(x, prepared)
    out = jax.block_until_ready(out)

    ref = reference(x, params)
    # bf16 MXU operands + approx reciprocal in the kernel -> relaxed tolerance
    np.testing.assert_allclose(np.asarray(out), np.asarray(ref),
                               atol=1e-2, rtol=2e-2)

    print("KERNEL_OK")
</pallas_src>

<mosaic_0001>
module attributes {stable_mosaic.version = 11 : i64} {
  func.func @mha_kernel(%arg0: i32, %arg1: memref<16x32xf32, #tpu.memory_space<vmem>>, %arg2: memref<32x96xbf16, #tpu.memory_space<vmem>>, %arg3: memref<1x96xf32, #tpu.memory_space<vmem>>, %arg4: memref<32x32xbf16, #tpu.memory_space<vmem>>, %arg5: memref<1x32xf32, #tpu.memory_space<vmem>>, %arg6: memref<16x32xf32, #tpu.memory_space<vmem>>) attributes {dimension_semantics = [#tpu.dimension_semantics<arbitrary>], iteration_bounds = array<i64: 1>, scalar_prefetch = 0 : i64, scratch_operands = 0 : i64, tpu.core_type = #tpu.core_type<tc>, window_params = [{pipeline_mode = #tpu.pipeline_mode<synchronous>, transform_indices = @transform_0, window_bounds = array<i64: 16, 32>}, {pipeline_mode = #tpu.pipeline_mode<synchronous>, transform_indices = @transform_1, window_bounds = array<i64: 32, 96>}, {pipeline_mode = #tpu.pipeline_mode<synchronous>, transform_indices = @transform_2, window_bounds = array<i64: 1, 96>}, {pipeline_mode = #tpu.pipeline_mode<synchronous>, transform_indices = @transform_3, window_bounds = array<i64: 32, 32>}, {pipeline_mode = #tpu.pipeline_mode<synchronous>, transform_indices = @transform_4, window_bounds = array<i64: 1, 32>}, {pipeline_mode = #tpu.pipeline_mode<synchronous>, transform_indices = @transform_5, window_bounds = array<i64: 16, 32>}]} {
    %c0 = arith.constant 0 : index
    %c0_0 = arith.constant 0 : index
    %0 = vector.load %arg1[%c0, %c0_0] : memref<16x32xf32, #tpu.memory_space<vmem>>, vector<16x32xf32>
    %1 = arith.truncf %0 : vector<16x32xf32> to vector<16x32xbf16>
    %c0_1 = arith.constant 0 : index
    %c0_2 = arith.constant 0 : index
    %2 = vector.load %arg2[%c0_1, %c0_2] : memref<32x96xbf16, #tpu.memory_space<vmem>>, vector<32x96xbf16>
    %cst = arith.constant dense<0.000000e+00> : vector<16x96xf32>
    %3 = tpu.matmul %1, %2, %cst {dimension_numbers = #tpu.dot_dimension_numbers<[1], [0], [0], [1], [0, 0, 1, 1], [], []>} : vector<16x32xbf16>, vector<32x96xbf16>, vector<16x96xf32> -> vector<16x96xf32>
    %c0_3 = arith.constant 0 : index
    %c0_4 = arith.constant 0 : index
    %4 = vector.load %arg3[%c0_3, %c0_4] : memref<1x96xf32, #tpu.memory_space<vmem>>, vector<1x96xf32>
    %5 = vector.broadcast %4 : vector<1x96xf32> to vector<16x96xf32>
    %6 = arith.addf %3, %5 : vector<16x96xf32>
    %c0_5 = arith.constant 0 : index
    %c0_6 = arith.constant 0 : index
    %7 = vector.load %arg5[%c0_5, %c0_6] : memref<1x32xf32, #tpu.memory_space<vmem>>, vector<1x32xf32>
    %8 = vector.extract_strided_slice %6 {offsets = [0, 0], sizes = [8, 96], strides = [1, 1]} : vector<16x96xf32> to vector<8x96xf32>
    %9 = vector.extract_strided_slice %8 {offsets = [0, 0], sizes = [8, 8], strides = [1, 1]} : vector<8x96xf32> to vector<8x8xf32>
    %10 = arith.truncf %9 : vector<8x8xf32> to vector<8x8xbf16>
    %11 = vector.extract_strided_slice %8 {offsets = [0, 32], sizes = [8, 8], strides = [1, 1]} : vector<8x96xf32> to vector<8x8xf32>
    %12 = arith.truncf %11 : vector<8x8xf32> to vector<8x8xbf16>
    %13 = vector.extract_strided_slice %8 {offsets = [0, 64], sizes = [8, 8], strides = [1, 1]} : vector<8x96xf32> to vector<8x8xf32>
    %14 = arith.truncf %13 : vector<8x8xf32> to vector<8x8xbf16>
    %cst_7 = arith.constant dense<0.000000e+00> : vector<8x8xf32>
    %15 = tpu.matmul %10, %12, %cst_7 {dimension_numbers = #tpu.dot_dimension_numbers<[1], [1], [0], [0], [0, 0, 1, 0], [], []>} : vector<8x8xbf16>, vector<8x8xbf16>, vector<8x8xf32> -> vector<8x8xf32>
    %cst_8 = arith.constant dense<0xFF800000> : vector<8xf32>
    %16 = vector.multi_reduction <maximumf>, %15, %cst_8 [1] : vector<8x8xf32> to vector<8xf32>
    %17 = vector.shape_cast %16 : vector<8xf32> to vector<8x1xf32>
    %18 = vector.broadcast %17 : vector<8x1xf32> to vector<8x8xf32>
    %19 = arith.subf %15, %18 : vector<8x8xf32>
    %20 = math.exp %19 : vector<8x8xf32>
    %cst_9 = arith.constant dense<0.000000e+00> : vector<8xf32>
    %21 = vector.multi_reduction <add>, %20, %cst_9 [1] : vector<8x8xf32> to vector<8xf32>
    %22 = vector.shape_cast %21 : vector<8xf32> to vector<8x1xf32>
    %23 = tpu.reciprocal %22 {approx = true} : vector<8x1xf32> -> vector<8x1xf32>
    %24 = vector.broadcast %23 : vector<8x1xf32> to vector<8x8xf32>
    %25 = arith.mulf %20, %24 : vector<8x8xf32>
    %26 = arith.truncf %25 : vector<8x8xf32> to vector<8x8xbf16>
    %cst_10 = arith.constant dense<0.000000e+00> : vector<8x8xf32>
    %27 = tpu.matmul %26, %14, %cst_10 {dimension_numbers = #tpu.dot_dimension_numbers<[1], [0], [0], [1], [0, 0, 1, 1], [], []>} : vector<8x8xbf16>, vector<8x8xbf16>, vector<8x8xf32> -> vector<8x8xf32>
    %28 = arith.truncf %27 : vector<8x8xf32> to vector<8x8xbf16>
    %c0_11 = arith.constant 0 : index
    %c0_12 = arith.constant 0 : index
    %29 = vector.load %arg4[%c0_11, %c0_12] : memref<32x32xbf16, #tpu.memory_space<vmem>>, vector<8x32xbf16>
    %cst_13 = arith.constant dense<0.000000e+00> : vector<8x32xf32>
    %30 = tpu.matmul %28, %29, %cst_13 {dimension_numbers = #tpu.dot_dimension_numbers<[1], [0], [0], [1], [0, 0, 1, 1], [], []>} : vector<8x8xbf16>, vector<8x32xbf16>, vector<8x32xf32> -> vector<8x32xf32>
    %31 = vector.extract_strided_slice %8 {offsets = [0, 8], sizes = [8, 8], strides = [1, 1]} : vector<8x96xf32> to vector<8x8xf32>
    %32 = arith.truncf %31 : vector<8x8xf32> to vector<8x8xbf16>
    %33 = vector.extract_strided_slice %8 {offsets = [0, 40], sizes = [8, 8], strides = [1, 1]} : vector<8x96xf32> to vector<8x8xf32>
    %34 = arith.truncf %33 : vector<8x8xf32> to vector<8x8xbf16>
    %35 = vector.extract_strided_slice %8 {offsets = [0, 72], sizes = [8, 8], strides = [1, 1]} : vector<8x96xf32> to vector<8x8xf32>
    %36 = arith.truncf %35 : vector<8x8xf32> to vector<8x8xbf16>
    %cst_14 = arith.constant dense<0.000000e+00> : vector<8x8xf32>
    %37 = tpu.matmul %32, %34, %cst_14 {dimension_numbers = #tpu.dot_dimension_numbers<[1], [1], [0], [0], [0, 0, 1, 0], [], []>} : vector<8x8xbf16>, vector<8x8xbf16>, vector<8x8xf32> -> vector<8x8xf32>
    %cst_15 = arith.constant dense<0xFF800000> : vector<8xf32>
    %38 = vector.multi_reduction <maximumf>, %37, %cst_15 [1] : vector<8x8xf32> to vector<8xf32>
    %39 = vector.shape_cast %38 : vector<8xf32> to vector<8x1xf32>
    %40 = vector.broadcast %39 : vector<8x1xf32> to vector<8x8xf32>
    %41 = arith.subf %37, %40 : vector<8x8xf32>
    %42 = math.exp %41 : vector<8x8xf32>
    %cst_16 = arith.constant dense<0.000000e+00> : vector<8xf32>
    %43 = vector.multi_reduction <add>, %42, %cst_16 [1] : vector<8x8xf32> to vector<8xf32>
    %44 = vector.shape_cast %43 : vector<8xf32> to vector<8x1xf32>
    %45 = tpu.reciprocal %44 {approx = true} : vector<8x1xf32> -> vector<8x1xf32>
    %46 = vector.broadcast %45 : vector<8x1xf32> to vector<8x8xf32>
    %47 = arith.mulf %42, %46 : vector<8x8xf32>
    %48 = arith.truncf %47 : vector<8x8xf32> to vector<8x8xbf16>
    %cst_17 = arith.constant dense<0.000000e+00> : vector<8x8xf32>
    %49 = tpu.matmul %48, %36, %cst_17 {dimension_numbers = #tpu.dot_dimension_numbers<[1], [0], [0], [1], [0, 0, 1, 1], [], []>} : vector<8x8xbf16>, vector<8x8xbf16>, vector<8x8xf32> -> vector<8x8xf32>
    %50 = arith.truncf %49 : vector<8x8xf32> to vector<8x8xbf16>
    %c8 = arith.constant 8 : index
    %c0_18 = arith.constant 0 : index
    %51 = vector.load %arg4[%c8, %c0_18] : memref<32x32xbf16, #tpu.memory_space<vmem>>, vector<8x32xbf16>
    %cst_19 = arith.constant dense<0.000000e+00> : vector<8x32xf32>
    %52 = tpu.matmul %50, %51, %cst_19 {dimension_numbers = #tpu.dot_dimension_numbers<[1], [0], [0], [1], [0, 0, 1, 1], [], []>} : vector<8x8xbf16>, vector<8x32xbf16>, vector<8x32xf32> -> vector<8x32xf32>
    %53 = arith.addf %30, %52 : vector<8x32xf32>
    %54 = vector.extract_strided_slice %8 {offsets = [0, 16], sizes = [8, 8], strides = [1, 1]} : vector<8x96xf32> to vector<8x8xf32>
    %55 = arith.truncf %54 : vector<8x8xf32> to vector<8x8xbf16>
    %56 = vector.extract_strided_slice %8 {offsets = [0, 48], sizes = [8, 8], strides = [1, 1]} : vector<8x96xf32> to vector<8x8xf32>
    %57 = arith.truncf %56 : vector<8x8xf32> to vector<8x8xbf16>
    %58 = vector.extract_strided_slice %8 {offsets = [0, 80], sizes = [8, 8], strides = [1, 1]} : vector<8x96xf32> to vector<8x8xf32>
    %59 = arith.truncf %58 : vector<8x8xf32> to vector<8x8xbf16>
    %cst_20 = arith.constant dense<0.000000e+00> : vector<8x8xf32>
    %60 = tpu.matmul %55, %57, %cst_20 {dimension_numbers = #tpu.dot_dimension_numbers<[1], [1], [0], [0], [0, 0, 1, 0], [], []>} : vector<8x8xbf16>, vector<8x8xbf16>, vector<8x8xf32> -> vector<8x8xf32>
    %cst_21 = arith.constant dense<0xFF800000> : vector<8xf32>
    %61 = vector.multi_reduction <maximumf>, %60, %cst_21 [1] : vector<8x8xf32> to vector<8xf32>
    %62 = vector.shape_cast %61 : vector<8xf32> to vector<8x1xf32>
    %63 = vector.broadcast %62 : vector<8x1xf32> to vector<8x8xf32>
    %64 = arith.subf %60, %63 : vector<8x8xf32>
    %65 = math.exp %64 : vector<8x8xf32>
    %cst_22 = arith.constant dense<0.000000e+00> : vector<8xf32>
    %66 = vector.multi_reduction <add>, %65, %cst_22 [1] : vector<8x8xf32> to vector<8xf32>
    %67 = vector.shape_cast %66 : vector<8xf32> to vector<8x1xf32>
    %68 = tpu.reciprocal %67 {approx = true} : vector<8x1xf32> -> vector<8x1xf32>
    %69 = vector.broadcast %68 : vector<8x1xf32> to vector<8x8xf32>
    %70 = arith.mulf %65, %69 : vector<8x8xf32>
    %71 = arith.truncf %70 : vector<8x8xf32> to vector<8x8xbf16>
    %cst_23 = arith.constant dense<0.000000e+00> : vector<8x8xf32>
    %72 = tpu.matmul %71, %59, %cst_23 {dimension_numbers = #tpu.dot_dimension_numbers<[1], [0], [0], [1], [0, 0, 1, 1], [], []>} : vector<8x8xbf16>, vector<8x8xbf16>, vector<8x8xf32> -> vector<8x8xf32>
    %73 = arith.truncf %72 : vector<8x8xf32> to vector<8x8xbf16>
    %c16 = arith.constant 16 : index
    %c0_24 = arith.constant 0 : index
    %74 = vector.load %arg4[%c16, %c0_24] : memref<32x32xbf16, #tpu.memory_space<vmem>>, vector<8x32xbf16>
    %cst_25 = arith.constant dense<0.000000e+00> : vector<8x32xf32>
    %75 = tpu.matmul %73, %74, %cst_25 {dimension_numbers = #tpu.dot_dimension_numbers<[1], [0], [0], [1], [0, 0, 1, 1], [], []>} : vector<8x8xbf16>, vector<8x32xbf16>, vector<8x32xf32> -> vector<8x32xf32>
    %76 = arith.addf %53, %75 : vector<8x32xf32>
    %77 = vector.extract_strided_slice %8 {offsets = [0, 24], sizes = [8, 8], strides = [1, 1]} : vector<8x96xf32> to vector<8x8xf32>
    %78 = arith.truncf %77 : vector<8x8xf32> to vector<8x8xbf16>
    %79 = vector.extract_strided_slice %8 {offsets = [0, 56], sizes = [8, 8], strides = [1, 1]} : vector<8x96xf32> to vector<8x8xf32>
    %80 = arith.truncf %79 : vector<8x8xf32> to vector<8x8xbf16>
    %81 = vector.extract_strided_slice %8 {offsets = [0, 88], sizes = [8, 8], strides = [1, 1]} : vector<8x96xf32> to vector<8x8xf32>
    %82 = arith.truncf %81 : vector<8x8xf32> to vector<8x8xbf16>
    %cst_26 = arith.constant dense<0.000000e+00> : vector<8x8xf32>
    %83 = tpu.matmul %78, %80, %cst_26 {dimension_numbers = #tpu.dot_dimension_numbers<[1], [1], [0], [0], [0, 0, 1, 0], [], []>} : vector<8x8xbf16>, vector<8x8xbf16>, vector<8x8xf32> -> vector<8x8xf32>
    %cst_27 = arith.constant dense<0xFF800000> : vector<8xf32>
    %84 = vector.multi_reduction <maximumf>, %83, %cst_27 [1] : vector<8x8xf32> to vector<8xf32>
    %85 = vector.shape_cast %84 : vector<8xf32> to vector<8x1xf32>
    %86 = vector.broadcast %85 : vector<8x1xf32> to vector<8x8xf32>
    %87 = arith.subf %83, %86 : vector<8x8xf32>
    %88 = math.exp %87 : vector<8x8xf32>
    %cst_28 = arith.constant dense<0.000000e+00> : vector<8xf32>
    %89 = vector.multi_reduction <add>, %88, %cst_28 [1] : vector<8x8xf32> to vector<8xf32>
    %90 = vector.shape_cast %89 : vector<8xf32> to vector<8x1xf32>
    %91 = tpu.reciprocal %90 {approx = true} : vector<8x1xf32> -> vector<8x1xf32>
    %92 = vector.broadcast %91 : vector<8x1xf32> to vector<8x8xf32>
    %93 = arith.mulf %88, %92 : vector<8x8xf32>
    %94 = arith.truncf %93 : vector<8x8xf32> to vector<8x8xbf16>
    %cst_29 = arith.constant dense<0.000000e+00> : vector<8x8xf32>
    %95 = tpu.matmul %94, %82, %cst_29 {dimension_numbers = #tpu.dot_dimension_numbers<[1], [0], [0], [1], [0, 0, 1, 1], [], []>} : vector<8x8xbf16>, vector<8x8xbf16>, vector<8x8xf32> -> vector<8x8xf32>
    %96 = arith.truncf %95 : vector<8x8xf32> to vector<8x8xbf16>
    %c24 = arith.constant 24 : index
    %c0_30 = arith.constant 0 : index
    %97 = vector.load %arg4[%c24, %c0_30] : memref<32x32xbf16, #tpu.memory_space<vmem>>, vector<8x32xbf16>
    %cst_31 = arith.constant dense<0.000000e+00> : vector<8x32xf32>
    %98 = tpu.matmul %96, %97, %cst_31 {dimension_numbers = #tpu.dot_dimension_numbers<[1], [0], [0], [1], [0, 0, 1, 1], [], []>} : vector<8x8xbf16>, vector<8x32xbf16>, vector<8x32xf32> -> vector<8x32xf32>
    %99 = arith.addf %76, %98 : vector<8x32xf32>
    %100 = vector.broadcast %7 : vector<1x32xf32> to vector<8x32xf32>
    %101 = arith.addf %99, %100 : vector<8x32xf32>
    %c0_32 = arith.constant 0 : index
    %c0_33 = arith.constant 0 : index
    %102 = vector.load %arg6[%c0_32, %c0_33] : memref<16x32xf32, #tpu.memory_space<vmem>>, vector<8x32xf32>
    tpu.vector_store %arg6[%c0_32, %c0_33], %101 {strides = array<i32>} : memref<16x32xf32, #tpu.memory_space<vmem>>, vector<8x32xf32>,
    %103 = vector.extract_strided_slice %6 {offsets = [8, 0], sizes = [8, 96], strides = [1, 1]} : vector<16x96xf32> to vector<8x96xf32>
    %104 = vector.extract_strided_slice %103 {offsets = [0, 0], sizes = [8, 8], strides = [1, 1]} : vector<8x96xf32> to vector<8x8xf32>
    %105 = arith.truncf %104 : vector<8x8xf32> to vector<8x8xbf16>
    %106 = vector.extract_strided_slice %103 {offsets = [0, 32], sizes = [8, 8], strides = [1, 1]} : vector<8x96xf32> to vector<8x8xf32>
    %107 = arith.truncf %106 : vector<8x8xf32> to vector<8x8xbf16>
    %108 = vector.extract_strided_slice %103 {offsets = [0, 64], sizes = [8, 8], strides = [1, 1]} : vector<8x96xf32> to vector<8x8xf32>
    %109 = arith.truncf %108 : vector<8x8xf32> to vector<8x8xbf16>
    %cst_34 = arith.constant dense<0.000000e+00> : vector<8x8xf32>
    %110 = tpu.matmul %105, %107, %cst_34 {dimension_numbers = #tpu.dot_dimension_numbers<[1], [1], [0], [0], [0, 0, 1, 0], [], []>} : vector<8x8xbf16>, vector<8x8xbf16>, vector<8x8xf32> -> vector<8x8xf32>
    %cst_35 = arith.constant dense<0xFF800000> : vector<8xf32>
    %111 = vector.multi_reduction <maximumf>, %110, %cst_35 [1] : vector<8x8xf32> to vector<8xf32>
    %112 = vector.shape_cast %111 : vector<8xf32> to vector<8x1xf32>
    %113 = vector.broadcast %112 : vector<8x1xf32> to vector<8x8xf32>
    %114 = arith.subf %110, %113 : vector<8x8xf32>
    %115 = math.exp %114 : vector<8x8xf32>
    %cst_36 = arith.constant dense<0.000000e+00> : vector<8xf32>
    %116 = vector.multi_reduction <add>, %115, %cst_36 [1] : vector<8x8xf32> to vector<8xf32>
    %117 = vector.shape_cast %116 : vector<8xf32> to vector<8x1xf32>
    %118 = tpu.reciprocal %117 {approx = true} : vector<8x1xf32> -> vector<8x1xf32>
    %119 = vector.broadcast %118 : vector<8x1xf32> to vector<8x8xf32>
    %120 = arith.mulf %115, %119 : vector<8x8xf32>
    %121 = arith.truncf %120 : vector<8x8xf32> to vector<8x8xbf16>
    %cst_37 = arith.constant dense<0.000000e+00> : vector<8x8xf32>
    %122 = tpu.matmul %121, %109, %cst_37 {dimension_numbers = #tpu.dot_dimension_numbers<[1], [0], [0], [1], [0, 0, 1, 1], [], []>} : vector<8x8xbf16>, vector<8x8xbf16>, vector<8x8xf32> -> vector<8x8xf32>
    %123 = arith.truncf %122 : vector<8x8xf32> to vector<8x8xbf16>
    %c0_38 = arith.constant 0 : index
    %c0_39 = arith.constant 0 : index
    %124 = vector.load %arg4[%c0_38, %c0_39] : memref<32x32xbf16, #tpu.memory_space<vmem>>, vector<8x32xbf16>
    %cst_40 = arith.constant dense<0.000000e+00> : vector<8x32xf32>
    %125 = tpu.matmul %123, %124, %cst_40 {dimension_numbers = #tpu.dot_dimension_numbers<[1], [0], [0], [1], [0, 0, 1, 1], [], []>} : vector<8x8xbf16>, vector<8x32xbf16>, vector<8x32xf32> -> vector<8x32xf32>
    %126 = vector.extract_strided_slice %103 {offsets = [0, 8], sizes = [8, 8], strides = [1, 1]} : vector<8x96xf32> to vector<8x8xf32>
    %127 = arith.truncf %126 : vector<8x8xf32> to vector<8x8xbf16>
    %128 = vector.extract_strided_slice %103 {offsets = [0, 40], sizes = [8, 8], strides = [1, 1]} : vector<8x96xf32> to vector<8x8xf32>
    %129 = arith.truncf %128 : vector<8x8xf32> to vector<8x8xbf16>
    %130 = vector.extract_strided_slice %103 {offsets = [0, 72], sizes = [8, 8], strides = [1, 1]} : vector<8x96xf32> to vector<8x8xf32>
    %131 = arith.truncf %130 : vector<8x8xf32> to vector<8x8xbf16>
    %cst_41 = arith.constant dense<0.000000e+00> : vector<8x8xf32>
    %132 = tpu.matmul %127, %129, %cst_41 {dimension_numbers = #tpu.dot_dimension_numbers<[1], [1], [0], [0], [0, 0, 1, 0], [], []>} : vector<8x8xbf16>, vector<8x8xbf16>, vector<8x8xf32> -> vector<8x8xf32>
    %cst_42 = arith.constant dense<0xFF800000> : vector<8xf32>
    %133 = vector.multi_reduction <maximumf>, %132, %cst_42 [1] : vector<8x8xf32> to vector<8xf32>
    %134 = vector.shape_cast %133 : vector<8xf32> to vector<8x1xf32>
    %135 = vector.broadcast %134 : vector<8x1xf32> to vector<8x8xf32>
    %136 = arith.subf %132, %135 : vector<8x8xf32>
    %137 = math.exp %136 : vector<8x8xf32>
    %cst_43 = arith.constant dense<0.000000e+00> : vector<8xf32>
    %138 = vector.multi_reduction <add>, %137, %cst_43 [1] : vector<8x8xf32> to vector<8xf32>
    %139 = vector.shape_cast %138 : vector<8xf32> to vector<8x1xf32>
    %140 = tpu.reciprocal %139 {approx = true} : vector<8x1xf32> -> vector<8x1xf32>
    %141 = vector.broadcast %140 : vector<8x1xf32> to vector<8x8xf32>
    %142 = arith.mulf %137, %141 : vector<8x8xf32>
    %143 = arith.truncf %142 : vector<8x8xf32> to vector<8x8xbf16>
    %cst_44 = arith.constant dense<0.000000e+00> : vector<8x8xf32>
    %144 = tpu.matmul %143, %131, %cst_44 {dimension_numbers = #tpu.dot_dimension_numbers<[1], [0], [0], [1], [0, 0, 1, 1], [], []>} : vector<8x8xbf16>, vector<8x8xbf16>, vector<8x8xf32> -> vector<8x8xf32>
    %145 = arith.truncf %144 : vector<8x8xf32> to vector<8x8xbf16>
    %c8_45 = arith.constant 8 : index
    %c0_46 = arith.constant 0 : index
    %146 = vector.load %arg4[%c8_45, %c0_46] : memref<32x32xbf16, #tpu.memory_space<vmem>>, vector<8x32xbf16>
    %cst_47 = arith.constant dense<0.000000e+00> : vector<8x32xf32>
    %147 = tpu.matmul %145, %146, %cst_47 {dimension_numbers = #tpu.dot_dimension_numbers<[1], [0], [0], [1], [0, 0, 1, 1], [], []>} : vector<8x8xbf16>, vector<8x32xbf16>, vector<8x32xf32> -> vector<8x32xf32>
    %148 = arith.addf %125, %147 : vector<8x32xf32>
    %149 = vector.extract_strided_slice %103 {offsets = [0, 16], sizes = [8, 8], strides = [1, 1]} : vector<8x96xf32> to vector<8x8xf32>
    %150 = arith.truncf %149 : vector<8x8xf32> to vector<8x8xbf16>
    %151 = vector.extract_strided_slice %103 {offsets = [0, 48], sizes = [8, 8], strides = [1, 1]} : vector<8x96xf32> to vector<8x8xf32>
    %152 = arith.truncf %151 : vector<8x8xf32> to vector<8x8xbf16>
    %153 = vector.extract_strided_slice %103 {offsets = [0, 80], sizes = [8, 8], strides = [1, 1]} : vector<8x96xf32> to vector<8x8xf32>
    %154 = arith.truncf %153 : vector<8x8xf32> to vector<8x8xbf16>
    %cst_48 = arith.constant dense<0.000000e+00> : vector<8x8xf32>
    %155 = tpu.matmul %150, %152, %cst_48 {dimension_numbers = #tpu.dot_dimension_numbers<[1], [1], [0], [0], [0, 0, 1, 0], [], []>} : vector<8x8xbf16>, vector<8x8xbf16>, vector<8x8xf32> -> vector<8x8xf32>
    %cst_49 = arith.constant dense<0xFF800000> : vector<8xf32>
    %156 = vector.multi_reduction <maximumf>, %155, %cst_49 [1] : vector<8x8xf32> to vector<8xf32>
    %157 = vector.shape_cast %156 : vector<8xf32> to vector<8x1xf32>
    %158 = vector.broadcast %157 : vector<8x1xf32> to vector<8x8xf32>
    %159 = arith.subf %155, %158 : vector<8x8xf32>
    %160 = math.exp %159 : vector<8x8xf32>
    %cst_50 = arith.constant dense<0.000000e+00> : vector<8xf32>
    %161 = vector.multi_reduction <add>, %160, %cst_50 [1] : vector<8x8xf32> to vector<8xf32>
    %162 = vector.shape_cast %161 : vector<8xf32> to vector<8x1xf32>
    %163 = tpu.reciprocal %162 {approx = true} : vector<8x1xf32> -> vector<8x1xf32>
    %164 = vector.broadcast %163 : vector<8x1xf32> to vector<8x8xf32>
    %165 = arith.mulf %160, %164 : vector<8x8xf32>
    %166 = arith.truncf %165 : vector<8x8xf32> to vector<8x8xbf16>
    %cst_51 = arith.constant dense<0.000000e+00> : vector<8x8xf32>
    %167 = tpu.matmul %166, %154, %cst_51 {dimension_numbers = #tpu.dot_dimension_numbers<[1], [0], [0], [1], [0, 0, 1, 1], [], []>} : vector<8x8xbf16>, vector<8x8xbf16>, vector<8x8xf32> -> vector<8x8xf32>
    %168 = arith.truncf %167 : vector<8x8xf32> to vector<8x8xbf16>
    %c16_52 = arith.constant 16 : index
    %c0_53 = arith.constant 0 : index
    %169 = vector.load %arg4[%c16_52, %c0_53] : memref<32x32xbf16, #tpu.memory_space<vmem>>, vector<8x32xbf16>
    %cst_54 = arith.constant dense<0.000000e+00> : vector<8x32xf32>
    %170 = tpu.matmul %168, %169, %cst_54 {dimension_numbers = #tpu.dot_dimension_numbers<[1], [0], [0], [1], [0, 0, 1, 1], [], []>} : vector<8x8xbf16>, vector<8x32xbf16>, vector<8x32xf32> -> vector<8x32xf32>
    %171 = arith.addf %148, %170 : vector<8x32xf32>
    %172 = vector.extract_strided_slice %103 {offsets = [0, 24], sizes = [8, 8], strides = [1, 1]} : vector<8x96xf32> to vector<8x8xf32>
    %173 = arith.truncf %172 : vector<8x8xf32> to vector<8x8xbf16>
    %174 = vector.extract_strided_slice %103 {offsets = [0, 56], sizes = [8, 8], strides = [1, 1]} : vector<8x96xf32> to vector<8x8xf32>
    %175 = arith.truncf %174 : vector<8x8xf32> to vector<8x8xbf16>
    %176 = vector.extract_strided_slice %103 {offsets = [0, 88], sizes = [8, 8], strides = [1, 1]} : vector<8x96xf32> to vector<8x8xf32>
    %177 = arith.truncf %176 : vector<8x8xf32> to vector<8x8xbf16>
    %cst_55 = arith.constant dense<0.000000e+00> : vector<8x8xf32>
    %178 = tpu.matmul %173, %175, %cst_55 {dimension_numbers = #tpu.dot_dimension_numbers<[1], [1], [0], [0], [0, 0, 1, 0], [], []>} : vector<8x8xbf16>, vector<8x8xbf16>, vector<8x8xf32> -> vector<8x8xf32>
    %cst_56 = arith.constant dense<0xFF800000> : vector<8xf32>
    %179 = vector.multi_reduction <maximumf>, %178, %cst_56 [1] : vector<8x8xf32> to vector<8xf32>
    %180 = vector.shape_cast %179 : vector<8xf32> to vector<8x1xf32>
    %181 = vector.broadcast %180 : vector<8x1xf32> to vector<8x8xf32>
    %182 = arith.subf %178, %181 : vector<8x8xf32>
    %183 = math.exp %182 : vector<8x8xf32>
    %cst_57 = arith.constant dense<0.000000e+00> : vector<8xf32>
    %184 = vector.multi_reduction <add>, %183, %cst_57 [1] : vector<8x8xf32> to vector<8xf32>
    %185 = vector.shape_cast %184 : vector<8xf32> to vector<8x1xf32>
    %186 = tpu.reciprocal %185 {approx = true} : vector<8x1xf32> -> vector<8x1xf32>
    %187 = vector.broadcast %186 : vector<8x1xf32> to vector<8x8xf32>
    %188 = arith.mulf %183, %187 : vector<8x8xf32>
    %189 = arith.truncf %188 : vector<8x8xf32> to vector<8x8xbf16>
    %cst_58 = arith.constant dense<0.000000e+00> : vector<8x8xf32>
    %190 = tpu.matmul %189, %177, %cst_58 {dimension_numbers = #tpu.dot_dimension_numbers<[1], [0], [0], [1], [0, 0, 1, 1], [], []>} : vector<8x8xbf16>, vector<8x8xbf16>, vector<8x8xf32> -> vector<8x8xf32>
    %191 = arith.truncf %190 : vector<8x8xf32> to vector<8x8xbf16>
    %c24_59 = arith.constant 24 : index
    %c0_60 = arith.constant 0 : index
    %192 = vector.load %arg4[%c24_59, %c0_60] : memref<32x32xbf16, #tpu.memory_space<vmem>>, vector<8x32xbf16>
    %cst_61 = arith.constant dense<0.000000e+00> : vector<8x32xf32>
    %193 = tpu.matmul %191, %192, %cst_61 {dimension_numbers = #tpu.dot_dimension_numbers<[1], [0], [0], [1], [0, 0, 1, 1], [], []>} : vector<8x8xbf16>, vector<8x32xbf16>, vector<8x32xf32> -> vector<8x32xf32>
    %194 = arith.addf %171, %193 : vector<8x32xf32>
    %195 = vector.broadcast %7 : vector<1x32xf32> to vector<8x32xf32>
    %196 = arith.addf %194, %195 : vector<8x32xf32>
    %c8_62 = arith.constant 8 : index
    %c0_63 = arith.constant 0 : index
    %197 = vector.load %arg6[%c8_62, %c0_63] : memref<16x32xf32, #tpu.memory_space<vmem>>, vector<8x32xf32>
    tpu.vector_store %arg6[%c8_62, %c0_63], %196 {strides = array<i32>} : memref<16x32xf32, #tpu.memory_space<vmem>>, vector<8x32xf32>,
    return
  }
  func.func @transform_0(%arg0: i32) -> (i32, i32) {
    %c0_i32 = arith.constant 0 : i32
    %c0_i32_0 = arith.constant 0 : i32
    %c0_i32_1 = arith.constant 0 : i32
    return %c0_i32, %c0_i32_0 : i32, i32
  }
  func.func @transform_1(%arg0: i32) -> (i32, i32) {
    %c0_i32 = arith.constant 0 : i32
    %c0_i32_0 = arith.constant 0 : i32
    %c0_i32_1 = arith.constant 0 : i32
    return %c0_i32, %c0_i32_0 : i32, i32
  }
  func.func @transform_2(%arg0: i32) -> (i32, i32) {
    %c0_i32 = arith.constant 0 : i32
    %c0_i32_0 = arith.constant 0 : i32
    %c0_i32_1 = arith.constant 0 : i32
    return %c0_i32, %c0_i32_0 : i32, i32
  }
  func.func @transform_3(%arg0: i32) -> (i32, i32) {
    %c0_i32 = arith.constant 0 : i32
    %c0_i32_0 = arith.constant 0 : i32
    %c0_i32_1 = arith.constant 0 : i32
    return %c0_i32, %c0_i32_0 : i32, i32
  }
  func.func @transform_4(%arg0: i32) -> (i32, i32) {
    %c0_i32 = arith.constant 0 : i32
    %c0_i32_0 = arith.constant 0 : i32
    %c0_i32_1 = arith.constant 0 : i32
    return %c0_i32, %c0_i32_0 : i32, i32
  }
  func.func @transform_5(%arg0: i32) -> (i32, i32) {
    %c0_i32 = arith.constant 0 : i32
    %c0_i32_0 = arith.constant 0 : i32
    %c0_i32_1 = arith.constant 0 : i32
    return %c0_i32, %c0_i32_0 : i32, i32
  }
}

</mosaic_0001>

<llo_original>
// kernel: tpu_custom_call.1
$region0: #{tpu_custom_call.1}
  #allocation0 [shape = 'u32[]', space=smem, size = 0x4, offset = 0x4, fixed_abs, tag = 'smem constant byte address 0x4 - core index']
  #allocation1 [shape = 'u32[72,128]{1,0:T(1,128)}', space=vmem, size = 0x9000, scoped, tag = 'internal scratch']
  %s0 = inlined_call_operand.hbm [shape: f32[16,32], index: 0, kind: input, shape index: {}]
  %s1 = inlined_call_operand.hbm [shape: bf16[32,96], index: 1, kind: input, shape index: {}]
  %s2 = inlined_call_operand.vmem [shape: f32[1,96], index: 2, kind: input, shape index: {}]
  %s3 = inlined_call_operand.hbm [shape: bf16[32,32], index: 3, kind: input, shape index: {}]
  %s4 = inlined_call_operand.vmem [shape: f32[1,32], index: 4, kind: input, shape index: {}]
  %s5 = inlined_call_operand.hbm [shape: f32[16,32], index: 5, kind: output, shape index: {}]
  %s6 = sld [smem:[#allocation0]]
  $region42: #{tpu_custom_call.1} parent=0
    _
  %s8 = ssub.s32 1, %s6
  %s9 = scalar_select 0, %s8, %s6
  $region1: #{tpu_custom_call.1} parent=0
    #allocation2 [shape = 'u8[8192]{0}', space=vmem, size = 0x2000, scoped, tag = 'input window, operand 0, single buffered']
    #allocation3 [shape = 's32[1]{0}', space=sflag, size = 0x4, scoped, tag = 'scoped memory for tpu_custom_call.1']
    #allocation4 [shape = 's32[1]{0}', space=sflag, size = 0x4, scoped, tag = 'scoped memory for tpu_custom_call.1']
    #allocation5 [shape = 'u8[8192]{0}', space=vmem, size = 0x2000, scoped, tag = 'input window, operand 1, single buffered']
    #allocation6 [shape = 's32[1]{0}', space=sflag, size = 0x4, scoped, tag = 'scoped memory for tpu_custom_call.1']
    #allocation7 [shape = 'u8[8192]{0}', space=vmem, size = 0x2000, scoped, tag = 'input window, operand 3, single buffered']
    #allocation8 [shape = 'u8[8192]{0}', space=vmem, size = 0x2000, scoped, tag = 'output window, operand 0, single buffered']
    %10 = vsyncpa [#allocation3], 0
    %11 = vsyncpa [#allocation6], 0
    %12 = vsyncpa [#allocation4], 0
    // Predicated region
    $region2: #{tpu_custom_call.1} parent=1 // pred_check
      _
    $region3: #{tpu_custom_call.1} parent=1 // pred_check_branch
      %14 = sbr.rel (0) target = $region5
    $region4: #{tpu_custom_call.1} parent=1 // pred_region
      %16 = vsyncadd [#allocation3], 0
      %s17 = sshll.u32 %s0, 4
      %s18 = int_to_ptr.hbm [resolvable:$true] %s17
      %s19 = sshll.u32 [#allocation2], 4
      %s20 = int_to_ptr.vmem [resolvable:$true] %s19
      %25 = dma.hbm_to_vmem [thread:$0]  %s18, 256, %s20, [#allocation3], 128, 128, 8
    $region5: #{tpu_custom_call.1} parent=1 // pred_fallthru
      _
    // Predicated region
    $region6: #{tpu_custom_call.1} parent=1 // pred_check
      _
    $region7: #{tpu_custom_call.1} parent=1 // pred_check_branch
      %27 = sbr.rel (0) target = $region9
    $region8: #{tpu_custom_call.1} parent=1 // pred_region
      %29 = vsyncadd [#allocation6], 0
      %s30 = sshll.u32 %s1, 4
      %s31 = int_to_ptr.hbm [resolvable:$true] %s30
      %s32 = sshll.u32 [#allocation5], 4
      %s33 = int_to_ptr.vmem [resolvable:$true] %s32
      %38 = dma.hbm_to_vmem [thread:$0]  %s31, 256, %s33, [#allocation6], 64, 64, 4
    $region9: #{tpu_custom_call.1} parent=1 // pred_fallthru
      _
    // Predicated region
    $region10: #{tpu_custom_call.1} parent=1 // pred_check
      _
    $region11: #{tpu_custom_call.1} parent=1 // pred_check_branch
      %40 = sbr.rel (0) target = $region13
    $region12: #{tpu_custom_call.1} parent=1 // pred_region
      _
    $region13: #{tpu_custom_call.1} parent=1 // pred_fallthru
      _
    // Predicated region
    $region14: #{tpu_custom_call.1} parent=1 // pred_check
      _
    $region15: #{tpu_custom_call.1} parent=1 // pred_check_branch
      %42 = sbr.rel (0) target = $region17
    $region16: #{tpu_custom_call.1} parent=1 // pred_region
      %44 = vsyncadd [#allocation6], 0
      %s45 = sshll.u32 %s3, 4
      %s46 = int_to_ptr.hbm [resolvable:$true] %s45
      %s47 = sshll.u32 [#allocation7], 4
      %s48 = int_to_ptr.vmem [resolvable:$true] %s47
      %53 = dma.hbm_to_vmem [thread:$0]  %s46, 256, %s48, [#allocation6], 64, 64, 4
    $region17: #{tpu_custom_call.1} parent=1 // pred_fallthru
      _
    // Predicated region
    $region18: #{tpu_custom_call.1} parent=1 // pred_check
      _
    $region19: #{tpu_custom_call.1} parent=1 // pred_check_branch
      %55 = sbr.rel (0) target = $region21
    $region20: #{tpu_custom_call.1} parent=1 // pred_region
      _
    $region21: #{tpu_custom_call.1} parent=1 // pred_fallthru
      _
    // Predicated region
    $region22: #{tpu_custom_call.1} parent=1 // pred_check
      _
    $region23: #{tpu_custom_call.1} parent=1 // pred_check_branch
      %57 = sbr.rel (0) target = $region25
    $region24: #{tpu_custom_call.1} parent=1 // pred_region
      %59 = dma.done [#allocation3], 256
    $region25: #{tpu_custom_call.1} parent=1 // pred_fallthru
      _
    // Predicated region
    $region26: #{tpu_custom_call.1} parent=1 // pred_check
      _
    $region27: #{tpu_custom_call.1} parent=1 // pred_check_branch
      %61 = sbr.rel (0) target = $region29
    $region28: #{tpu_custom_call.1} parent=1 // pred_region
      %63 = dma.done [#allocation6], 256
    $region29: #{tpu_custom_call.1} parent=1 // pred_fallthru
      _
    // Predicated region
    $region30: #{tpu_custom_call.1} parent=1 // pred_check
      _
    $region31: #{tpu_custom_call.1} parent=1 // pred_check_branch
      %65 = sbr.rel (0) target = $region33
    $region32: #{tpu_custom_call.1} parent=1 // pred_region
      %67 = dma.done [#allocation6], 256
    $region33: #{tpu_custom_call.1} parent=1 // pred_fallthru
      _
    %v69 = vld [vmem:[#allocation2] sm:$0xff]
    %v70 = vld [vmem:[#allocation2 + $0x8] sm:$0xff]
    %v71 = vpack.c.bf16 %v70, %v69
    %v72 = vld [vmem:[#allocation5] sm:$0xf]
    %v73 = vld [vmem:[#allocation5 + $0x4] sm:$0xf]
    %v74 = vld [vmem:[#allocation5 + $0x8] sm:$0xf]
    %v75 = vld [vmem:[#allocation5 + $0xc] sm:$0xf]
    %v76 = vld [vmem:[%s2] sm:$0x1]
    %v78 = vperm.slane %v76, 0
    %v84 = vunpack.c.l.b16 %v72
    %v85 = vunpack.c.l.b16 %v73
    %v86 = vunpack.c.l.b16 %v74
    %v87 = vunpack.c.l.b16 %v75
    %v88 = vpack.c.b16 %v85, %v84
    %v89 = vpack.c.b16 %v87, %v86
    %vm92 = vcmask 261120
    %v94 = vsel %vm92, %v71, 0
    %96 = vmatpush.bf16.msra.mxu0 0
    %97 = vmatpush.bf16.msra.mxu0 0
    %98 = vmatpush.bf16.msra.mxu0 0
    %99 = vmatpush.bf16.msra.mxu0 0
    %100 = vmatpush.bf16.msra.mxu0 0
    %101 = vmatpush.bf16.msra.mxu0 0
    %102 = vmatpush.bf16.msra.mxu0 %v89
    %103 = vmatpush.bf16.msra.mxu0 %v88
    %104 = vmatmul.bf16.gmra.mxu0 %v94
    %v105 = vpop.f32.mrf.mxu0
    %v106 = vadd.f32 %v78, %v105
    %v107 = vpop.f32.mrf.mxu0
    %v108 = vadd.f32 %v78, %v107
    %109 = vdwg.mxu0
    %v110 = vld [vmem:[%s4] sm:$0x1]
    %v111 = vpack.c.bf16 %v106, %v106
    %113 = vrot.lane.b32.xlu0 %v111, 96
    %v114 = vpop.permute.xlu0 %113
    %vm115 = vcmask 64512
    %v117 = vsel %vm115, %v111, 0
    %v120 = vsel %vm115, %v114, 0
    %122 = vmatpush.bf16.xpose.msra.mxu0 0
    %123 = vmatpush.bf16.xpose.msra.mxu0 0
    %124 = vmatpush.bf16.xpose.msra.mxu0 0
    %125 = vmatpush.bf16.xpose.msra.mxu0 0
    %126 = vmatpush.bf16.xpose.msra.mxu0 0
    %127 = vmatpush.bf16.xpose.msra.mxu0 0
    %128 = vmatpush.bf16.xpose.msra.mxu0 0
    %129 = vmatpush.bf16.xpose.msra.mxu0 %v120
    %130 = vmatmul.bf16.gmra.mxu0 %v117
    %v131 = vpop.f32.mrf.mxu0
    %v132 = vadd.f32 0.0, %v131
    %v133 = vpop.f32.mrf.mxu0
    %134 = vdwg.mxu0
    %v135 = vsel %vm115, %v132, -inf
    %136 = vmax.xlane.f32.xlu0 %v135
    %v137 = vpop.xlane.xlu0 %136
    %v138 = vsub.f32 %v132, %v137
    %v139 = vmul.f32 %v138, 1.442695
    %v140 = vpow.pop %v139
    %v141 = vsel %vm115, %v140, 0.0
    %142 = vadd.xlane.f32.xlu0 %v141
    %v143 = vpop.xlane.xlu0 %142
    %v144 = vrcp.pop %v143
    %v145 = vmul.f32 %v140, %v144
    %v146 = vpack.c.bf16 %v145, %v145
    %147 = vrot.lane.b32.xlu0 %v111, 64
    %v148 = vpop.permute.xlu0 %147
    %v150 = vsel %vm115, %v146, 0
    %vm152 = vcmask 1043456
    %v154 = vsel %vm152, %v148, 0
    %156 = vmatpush.bf16.msra.mxu0 0
    %157 = vmatpush.bf16.msra.mxu0 0
    %158 = vmatpush.bf16.msra.mxu0 0
    %159 = vmatpush.bf16.msra.mxu0 0
    %160 = vmatpush.bf16.msra.mxu0 0
    %161 = vmatpush.bf16.msra.mxu0 0
    %162 = vmatpush.bf16.msra.mxu0 0
    %163 = vmatpush.bf16.msra.mxu0 %v154
    %164 = vmatmul.bf16.gmra.mxu0 %v150
    %v165 = vpop.f32.mrf.mxu0
    %v166 = vadd.f32 0.0, %v165
    %v167 = vpop.f32.mrf.mxu0
    %168 = vdwg.mxu0
    %v169 = vpack.c.bf16 %v166, %v166
    %v170 = vld [vmem:[#allocation7] sm:$0xf]
    %171 = vrot.lane.b32.xlu0 %v111, 120
    %v172 = vpop.permute.xlu0 %171
    %173 = vrot.lane.b32.xlu0 %v111, 88
    %v174 = vpop.permute.xlu0 %173
    %v176 = vsel %vm115, %v172, 0
    %v179 = vsel %vm115, %v174, 0
    %181 = vmatpush.bf16.xpose.msra.mxu0 0
    %182 = vmatpush.bf16.xpose.msra.mxu0 0
    %183 = vmatpush.bf16.xpose.msra.mxu0 0
    %184 = vmatpush.bf16.xpose.msra.mxu0 0
    %185 = vmatpush.bf16.xpose.msra.mxu0 0
    %186 = vmatpush.bf16.xpose.msra.mxu0 0
    %187 = vmatpush.bf16.xpose.msra.mxu0 0
    %188 = vmatpush.bf16.xpose.msra.mxu0 %v179
    %189 = vmatmul.bf16.gmra.mxu0 %v176
    %v190 = vpop.f32.mrf.mxu0
    %v191 = vadd.f32 0.0, %v190
    %v192 = vpop.f32.mrf.mxu0
    %193 = vdwg.mxu0
    %v194 = vsel %vm115, %v191, -inf
    %195 = vmax.xlane.f32.xlu0 %v194
    %v196 = vpop.xlane.xlu0 %195
    %v197 = vsub.f32 %v191, %v196
    %v198 = vmul.f32 %v197, 1.442695
    %v199 = vpow.pop %v198
    %v200 = vsel %vm115, %v199, 0.0
    %201 = vadd.xlane.f32.xlu0 %v200
    %v202 = vpop.xlane.xlu0 %201
    %v203 = vrcp.pop %v202
    %v204 = vmul.f32 %v199, %v203
    %v205 = vpack.c.bf16 %v204, %v204
    %206 = vrot.lane.b32.xlu0 %v111, 56
    %v207 = vpop.permute.xlu0 %206
    %v209 = vsel %vm115, %v205, 0
    %v212 = vsel %vm152, %v207, 0
    %214 = vmatpush.bf16.msra.mxu0 0
    %215 = vmatpush.bf16.msra.mxu0 0
    %216 = vmatpush.bf16.msra.mxu0 0
    %217 = vmatpush.bf16.msra.mxu0 0
    %218 = vmatpush.bf16.msra.mxu0 0
    %219 = vmatpush.bf16.msra.mxu0 0
    %220 = vmatpush.bf16.msra.mxu0 0
    %221 = vmatpush.bf16.msra.mxu0 %v212
    %222 = vmatmul.bf16.gmra.mxu0 %v209
    %v223 = vpop.f32.mrf.mxu0
    %v224 = vadd.f32 0.0, %v223
    %v225 = vpop.f32.mrf.mxu0
    %226 = vdwg.mxu0
    %v227 = vpack.c.bf16 %v224, %v224
    %v228 = vld [vmem:[#allocation7 + $0x4] sm:$0xf]
    %v230 = vsel %vm115, %v227, 0
    %v233 = vsel %vm152, %v228, 0
    %235 = vmatpush.bf16.msra.mxu0 0
    %236 = vmatpush.bf16.msra.mxu0 0
    %237 = vmatpush.bf16.msra.mxu0 0
    %238 = vmatpush.bf16.msra.mxu0 0
    %239 = vmatpush.bf16.msra.mxu0 0
    %240 = vmatpush.bf16.msra.mxu0 0
    %241 = vmatpush.bf16.msra.mxu0 0
    %242 = vmatpush.bf16.msra.mxu0 %v233
    %243 = vmatmul.bf16.gmra.mxu0 %v230
    %v244 = vpop.f32.mrf.mxu0
    %v245 = vadd.f32 0.0, %v244
    %v246 = vpop.f32.mrf.mxu0
    %247 = vdwg.mxu0
    %v249 = vsel %vm115, %v169, 0
    %v252 = vsel %vm152, %v170, 0
    %254 = vmatpush.bf16.msra.mxu0 0
    %255 = vmatpush.bf16.msra.mxu0 0
    %256 = vmatpush.bf16.msra.mxu0 0
    %257 = vmatpush.bf16.msra.mxu0 0
    %258 = vmatpush.bf16.msra.mxu0 0
    %259 = vmatpush.bf16.msra.mxu0 0
    %260 = vmatpush.bf16.msra.mxu0 0
    %261 = vmatpush.bf16.msra.mxu0 %v252
    %262 = vmatmul.bf16.gmra.mxu0 %v249
    %v263 = vpop.f32.mrf.mxu0
    %v264 = vadd.f32 %v245, %v263
    %v265 = vpop.f32.mrf.mxu0
    %266 = vdwg.mxu0
    %267 = vrot.lane.b32.xlu0 %v111, 112
    %v268 = vpop.permute.xlu0 %267
    %269 = vrot.lane.b32.xlu0 %v111, 80
    %v270 = vpop.permute.xlu0 %269
    %v272 = vsel %vm115, %v268, 0
    %v275 = vsel %vm115, %v270, 0
    %277 = vmatpush.bf16.xpose.msra.mxu0 0
    %278 = vmatpush.bf16.xpose.msra.mxu0 0
    %279 = vmatpush.bf16.xpose.msra.mxu0 0
    %280 = vmatpush.bf16.xpose.msra.mxu0 0
    %281 = vmatpush.bf16.xpose.msra.mxu0 0
    %282 = vmatpush.bf16.xpose.msra.mxu0 0
    %283 = vmatpush.bf16.xpose.msra.mxu0 0
    %284 = vmatpush.bf16.xpose.msra.mxu0 %v275
    %285 = vmatmul.bf16.gmra.mxu0 %v272
    %v286 = vpop.f32.mrf.mxu0
    %v287 = vadd.f32 0.0, %v286
    %v288 = vpop.f32.mrf.mxu0
    %289 = vdwg.mxu0
    %v290 = vsel %vm115, %v287, -inf
    %291 = vmax.xlane.f32.xlu0 %v290
    %v292 = vpop.xlane.xlu0 %291
    %v293 = vsub.f32 %v287, %v292
    %v294 = vmul.f32 %v293, 1.442695
    %v295 = vpow.pop %v294
    %v296 = vsel %vm115, %v295, 0.0
    %297 = vadd.xlane.f32.xlu0 %v296
    %v298 = vpop.xlane.xlu0 %297
    %v299 = vrcp.pop %v298
    %v300 = vmul.f32 %v295, %v299
    %v301 = vpack.c.bf16 %v300, %v300
    %302 = vrot.lane.b32.xlu0 %v111, 48
    %v303 = vpop.permute.xlu0 %302
    %v305 = vsel %vm115, %v301, 0
    %v308 = vsel %vm152, %v303, 0
    %310 = vmatpush.bf16.msra.mxu0 0
    %311 = vmatpush.bf16.msra.mxu0 0
    %312 = vmatpush.bf16.msra.mxu0 0
    %313 = vmatpush.bf16.msra.mxu0 0
    %314 = vmatpush.bf16.msra.mxu0 0
    %315 = vmatpush.bf16.msra.mxu0 0
    %316 = vmatpush.bf16.msra.mxu0 0
    %317 = vmatpush.bf16.msra.mxu0 %v308
    %318 = vmatmul.bf16.gmra.mxu0 %v305
    %v319 = vpop.f32.mrf.mxu0
    %v320 = vadd.f32 0.0, %v319
    %v321 = vpop.f32.mrf.mxu0
    %322 = vdwg.mxu0
    %v323 = vpack.c.bf16 %v320, %v320
    %v324 = vld [vmem:[#allocation7 + $0x8] sm:$0xf]
    %v326 = vsel %vm115, %v323, 0
    %v329 = vsel %vm152, %v324, 0
    %331 = vmatpush.bf16.msra.mxu0 0
    %332 = vmatpush.bf16.msra.mxu0 0
    %333 = vmatpush.bf16.msra.mxu0 0
    %334 = vmatpush.bf16.msra.mxu0 0
    %335 = vmatpush.bf16.msra.mxu0 0
    %336 = vmatpush.bf16.msra.mxu0 0
    %337 = vmatpush.bf16.msra.mxu0 0
    %338 = vmatpush.bf16.msra.mxu0 %v329
    %339 = vmatmul.bf16.gmra.mxu0 %v326
    %v340 = vpop.f32.mrf.mxu0
    %v341 = vadd.f32 0.0, %v340
    %v342 = vpop.f32.mrf.mxu0
    %343 = vdwg.mxu0
    %v344 = vadd.f32 %v264, %v341
    %345 = vrot.lane.b32.xlu0 %v111, 104
    %v346 = vpop.permute.xlu0 %345
    %347 = vrot.lane.b32.xlu0 %v111, 72
    %v348 = vpop.permute.xlu0 %347
    %v350 = vsel %vm115, %v346, 0
    %v353 = vsel %vm115, %v348, 0
    %355 = vmatpush.bf16.xpose.msra.mxu0 0
    %356 = vmatpush.bf16.xpose.msra.mxu0 0
    %357 = vmatpush.bf16.xpose.msra.mxu0 0
    %358 = vmatpush.bf16.xpose.msra.mxu0 0
    %359 = vmatpush.bf16.xpose.msra.mxu0 0
    %360 = vmatpush.bf16.xpose.msra.mxu0 0
    %361 = vmatpush.bf16.xpose.msra.mxu0 0
    %362 = vmatpush.bf16.xpose.msra.mxu0 %v353
    %363 = vmatmul.bf16.gmra.mxu0 %v350
    %v364 = vpop.f32.mrf.mxu0
    %v365 = vadd.f32 0.0, %v364
    %v366 = vpop.f32.mrf.mxu0
    %367 = vdwg.mxu0
    %v368 = vsel %vm115, %v365, -inf
    %369 = vmax.xlane.f32.xlu0 %v368
    %v370 = vpop.xlane.xlu0 %369
    %v371 = vsub.f32 %v365, %v370
    %v372 = vmul.f32 %v371, 1.442695
    %v373 = vpow.pop %v372
    %v374 = vsel %vm115, %v373, 0.0
    %375 = vadd.xlane.f32.xlu0 %v374
    %v376 = vpop.xlane.xlu0 %375
    %v377 = vrcp.pop %v376
    %v378 = vmul.f32 %v373, %v377
    %v379 = vpack.c.bf16 %v378, %v378
    %380 = vrot.lane.b32.xlu0 %v111, 40
    %v381 = vpop.permute.xlu0 %380
    %v383 = vsel %vm115, %v379, 0
    %v386 = vsel %vm152, %v381, 0
    %388 = vmatpush.bf16.msra.mxu0 0
    %389 = vmatpush.bf16.msra.mxu0 0
    %390 = vmatpush.bf16.msra.mxu0 0
    %391 = vmatpush.bf16.msra.mxu0 0
    %392 = vmatpush.bf16.msra.mxu0 0
    %393 = vmatpush.bf16.msra.mxu0 0
    %394 = vmatpush.bf16.msra.mxu0 0
    %395 = vmatpush.bf16.msra.mxu0 %v386
    %396 = vmatmul.bf16.gmra.mxu0 %v383
    %v397 = vpop.f32.mrf.mxu0
    %v398 = vadd.f32 0.0, %v397
    %v399 = vpop.f32.mrf.mxu0
    %400 = vdwg.mxu0
    %v401 = vpack.c.bf16 %v398, %v398
    %v402 = vld [vmem:[#allocation7 + $0xc] sm:$0xf]
    %v404 = vsel %vm115, %v401, 0
    %v407 = vsel %vm152, %v402, 0
    %409 = vmatpush.bf16.msra.mxu0 0
    %410 = vmatpush.bf16.msra.mxu0 0
    %411 = vmatpush.bf16.msra.mxu0 0
    %412 = vmatpush.bf16.msra.mxu0 0
    %413 = vmatpush.bf16.msra.mxu0 0
    %414 = vmatpush.bf16.msra.mxu0 0
    %415 = vmatpush.bf16.msra.mxu0 0
    %416 = vmatpush.bf16.msra.mxu0 %v407
    %417 = vmatmul.bf16.gmra.mxu0 %v404
    %v418 = vpop.f32.mrf.mxu0
    %v419 = vadd.f32 0.0, %v418
    %v420 = vpop.f32.mrf.mxu0
    %421 = vdwg.mxu0
    %v422 = vadd.f32 %v344, %v419
    %v424 = vperm.slane %v110, 0
    %v426 = vadd.f32 %v422, %v424
    %427 = vst.msk [vmem:[#allocation8] sm:$0xff] %vm92, %v426
    %v428 = vpack.c.bf16 %v108, %v108
    %430 = vrot.lane.b32.xlu0 %v428, 96
    %v431 = vpop.permute.xlu0 %430
    %v433 = vsel %vm115, %v428, 0
    %v436 = vsel %vm115, %v431, 0
    %438 = vmatpush.bf16.xpose.msra.mxu0 0
    %439 = vmatpush.bf16.xpose.msra.mxu0 0
    %440 = vmatpush.bf16.xpose.msra.mxu0 0
    %441 = vmatpush.bf16.xpose.msra.mxu0 0
    %442 = vmatpush.bf16.xpose.msra.mxu0 0
    %443 = vmatpush.bf16.xpose.msra.mxu0 0
    %444 = vmatpush.bf16.xpose.msra.mxu0 0
    %445 = vmatpush.bf16.xpose.msra.mxu0 %v436
    %446 = vmatmul.bf16.gmra.mxu0 %v433
    %v447 = vpop.f32.mrf.mxu0
    %v448 = vadd.f32 0.0, %v447
    %v449 = vpop.f32.mrf.mxu0
    %450 = vdwg.mxu0
    %v451 = vsel %vm115, %v448, -inf
    %452 = vmax.xlane.f32.xlu0 %v451
    %v453 = vpop.xlane.xlu0 %452
    %v454 = vsub.f32 %v448, %v453
    %v455 = vmul.f32 %v454, 1.442695
    %v456 = vpow.pop %v455
    %v457 = vsel %vm115, %v456, 0.0
    %458 = vadd.xlane.f32.xlu0 %v457
    %v459 = vpop.xlane.xlu0 %458
    %v460 = vrcp.pop %v459
    %v461 = vmul.f32 %v456, %v460
    %v462 = vpack.c.bf16 %v461, %v461
    %463 = vrot.lane.b32.xlu0 %v428, 64
    %v464 = vpop.permute.xlu0 %463
    %v466 = vsel %vm115, %v462, 0
    %v469 = vsel %vm152, %v464, 0
    %471 = vmatpush.bf16.msra.mxu0 0
    %472 = vmatpush.bf16.msra.mxu0 0
    %473 = vmatpush.bf16.msra.mxu0 0
    %474 = vmatpush.bf16.msra.mxu0 0
    %475 = vmatpush.bf16.msra.mxu0 0
    %476 = vmatpush.bf16.msra.mxu0 0
    %477 = vmatpush.bf16.msra.mxu0 0
    %478 = vmatpush.bf16.msra.mxu0 %v469
    %479 = vmatmul.bf16.gmra.mxu0 %v466
    %v480 = vpop.f32.mrf.mxu0
    %v481 = vadd.f32 0.0, %v480
    %v482 = vpop.f32.mrf.mxu0
    %483 = vdwg.mxu0
    %v484 = vpack.c.bf16 %v481, %v481
    %v485 = vld [vmem:[#allocation7] sm:$0xf]
    %486 = vrot.lane.b32.xlu0 %v428, 120
    %v487 = vpop.permute.xlu0 %486
    %488 = vrot.lane.b32.xlu0 %v428, 88
    %v489 = vpop.permute.xlu0 %488
    %v491 = vsel %vm115, %v487, 0
    %v494 = vsel %vm115, %v489, 0
    %496 = vmatpush.bf16.xpose.msra.mxu0 0
    %497 = vmatpush.bf16.xpose.msra.mxu0 0
    %498 = vmatpush.bf16.xpose.msra.mxu0 0
    %499 = vmatpush.bf16.xpose.msra.mxu0 0
    %500 = vmatpush.bf16.xpose.msra.mxu0 0
    %501 = vmatpush.bf16.xpose.msra.mxu0 0
    %502 = vmatpush.bf16.xpose.msra.mxu0 0
    %503 = vmatpush.bf16.xpose.msra.mxu0 %v494
    %504 = vmatmul.bf16.gmra.mxu0 %v491
    %v505 = vpop.f32.mrf.mxu0
    %v506 = vadd.f32 0.0, %v505
    %v507 = vpop.f32.mrf.mxu0
    %508 = vdwg.mxu0
    %v509 = vsel %vm115, %v506, -inf
    %510 = vmax.xlane.f32.xlu0 %v509
    %v511 = vpop.xlane.xlu0 %510
    %v512 = vsub.f32 %v506, %v511
    %v513 = vmul.f32 %v512, 1.442695
    %v514 = vpow.pop %v513
    %v515 = vsel %vm115, %v514, 0.0
    %516 = vadd.xlane.f32.xlu0 %v515
    %v517 = vpop.xlane.xlu0 %516
    %v518 = vrcp.pop %v517
    %v519 = vmul.f32 %v514, %v518
    %v520 = vpack.c.bf16 %v519, %v519
    %521 = vrot.lane.b32.xlu0 %v428, 56
    %v522 = vpop.permute.xlu0 %521
    %v524 = vsel %vm115, %v520, 0
    %v527 = vsel %vm152, %v522, 0
    %529 = vmatpush.bf16.msra.mxu0 0
    %530 = vmatpush.bf16.msra.mxu0 0
    %531 = vmatpush.bf16.msra.mxu0 0
    %532 = vmatpush.bf16.msra.mxu0 0
    %533 = vmatpush.bf16.msra.mxu0 0
    %534 = vmatpush.bf16.msra.mxu0 0
    %535 = vmatpush.bf16.msra.mxu0 0
    %536 = vmatpush.bf16.msra.mxu0 %v527
    %537 = vmatmul.bf16.gmra.mxu0 %v524
    %v538 = vpop.f32.mrf.mxu0
    %v539 = vadd.f32 0.0, %v538
    %v540 = vpop.f32.mrf.mxu0
    %541 = vdwg.mxu0
    %v542 = vpack.c.bf16 %v539, %v539
    %v543 = vld [vmem:[#allocation7 + $0x4] sm:$0xf]
    %v545 = vsel %vm115, %v542, 0
    %v548 = vsel %vm152, %v543, 0
    %550 = vmatpush.bf16.msra.mxu0 0
    %551 = vmatpush.bf16.msra.mxu0 0
    %552 = vmatpush.bf16.msra.mxu0 0
    %553 = vmatpush.bf16.msra.mxu0 0
    %554 = vmatpush.bf16.msra.mxu0 0
    %555 = vmatpush.bf16.msra.mxu0 0
    %556 = vmatpush.bf16.msra.mxu0 0
    %557 = vmatpush.bf16.msra.mxu0 %v548
    %558 = vmatmul.bf16.gmra.mxu0 %v545
    %v559 = vpop.f32.mrf.mxu0
    %v560 = vadd.f32 0.0, %v559
    %v561 = vpop.f32.mrf.mxu0
    %562 = vdwg.mxu0
    %v564 = vsel %vm115, %v484, 0
    %v567 = vsel %vm152, %v485, 0
    %569 = vmatpush.bf16.msra.mxu0 0
    %570 = vmatpush.bf16.msra.mxu0 0
    %571 = vmatpush.bf16.msra.mxu0 0
    %572 = vmatpush.bf16.msra.mxu0 0
    %573 = vmatpush.bf16.msra.mxu0 0
    %574 = vmatpush.bf16.msra.mxu0 0
    %575 = vmatpush.bf16.msra.mxu0 0
    %576 = vmatpush.bf16.msra.mxu0 %v567
    %577 = vmatmul.bf16.gmra.mxu0 %v564
    %v578 = vpop.f32.mrf.mxu0
    %v579 = vadd.f32 %v560, %v578
    %v580 = vpop.f32.mrf.mxu0
    %581 = vdwg.mxu0
    %582 = vrot.lane.b32.xlu0 %v428, 112
    %v583 = vpop.permute.xlu0 %582
    %584 = vrot.lane.b32.xlu0 %v428, 80
    %v585 = vpop.permute.xlu0 %584
    %v587 = vsel %vm115, %v583, 0
    %v590 = vsel %vm115, %v585, 0
    %592 = vmatpush.bf16.xpose.msra.mxu0 0
    %593 = vmatpush.bf16.xpose.msra.mxu0 0
    %594 = vmatpush.bf16.xpose.msra.mxu0 0
    %595 = vmatpush.bf16.xpose.msra.mxu0 0
    %596 = vmatpush.bf16.xpose.msra.mxu0 0
    %597 = vmatpush.bf16.xpose.msra.mxu0 0
    %598 = vmatpush.bf16.xpose.msra.mxu0 0
    %599 = vmatpush.bf16.xpose.msra.mxu0 %v590
    %600 = vmatmul.bf16.gmra.mxu0 %v587
    %v601 = vpop.f32.mrf.mxu0
    %v602 = vadd.f32 0.0, %v601
    %v603 = vpop.f32.mrf.mxu0
    %604 = vdwg.mxu0
    %v605 = vsel %vm115, %v602, -inf
    %606 = vmax.xlane.f32.xlu0 %v605
    %v607 = vpop.xlane.xlu0 %606
    %v608 = vsub.f32 %v602, %v607
    %v609 = vmul.f32 %v608, 1.442695
    %v610 = vpow.pop %v609
    %v611 = vsel %vm115, %v610, 0.0
    %612 = vadd.xlane.f32.xlu0 %v611
    %v613 = vpop.xlane.xlu0 %612
    %v614 = vrcp.pop %v613
    %v615 = vmul.f32 %v610, %v614
    %v616 = vpack.c.bf16 %v615, %v615
    %617 = vrot.lane.b32.xlu0 %v428, 48
    %v618 = vpop.permute.xlu0 %617
    %v620 = vsel %vm115, %v616, 0
    %v623 = vsel %vm152, %v618, 0
    %625 = vmatpush.bf16.msra.mxu0 0
    %626 = vmatpush.bf16.msra.mxu0 0
    %627 = vmatpush.bf16.msra.mxu0 0
    %628 = vmatpush.bf16.msra.mxu0 0
    %629 = vmatpush.bf16.msra.mxu0 0
    %630 = vmatpush.bf16.msra.mxu0 0
    %631 = vmatpush.bf16.msra.mxu0 0
    %632 = vmatpush.bf16.msra.mxu0 %v623
    %633 = vmatmul.bf16.gmra.mxu0 %v620
    %v634 = vpop.f32.mrf.mxu0
    %v635 = vadd.f32 0.0, %v634
    %v636 = vpop.f32.mrf.mxu0
    %637 = vdwg.mxu0
    %v638 = vpack.c.bf16 %v635, %v635
    %v639 = vld [vmem:[#allocation7 + $0x8] sm:$0xf]
    %v641 = vsel %vm115, %v638, 0
    %v644 = vsel %vm152, %v639, 0
    %646 = vmatpush.bf16.msra.mxu0 0
    %647 = vmatpush.bf16.msra.mxu0 0
    %648 = vmatpush.bf16.msra.mxu0 0
    %649 = vmatpush.bf16.msra.mxu0 0
    %650 = vmatpush.bf16.msra.mxu0 0
    %651 = vmatpush.bf16.msra.mxu0 0
    %652 = vmatpush.bf16.msra.mxu0 0
    %653 = vmatpush.bf16.msra.mxu0 %v644
    %654 = vmatmul.bf16.gmra.mxu0 %v641
    %v655 = vpop.f32.mrf.mxu0
    %v656 = vadd.f32 0.0, %v655
    %v657 = vpop.f32.mrf.mxu0
    %658 = vdwg.mxu0
    %v659 = vadd.f32 %v579, %v656
    %660 = vrot.lane.b32.xlu0 %v428, 104
    %v661 = vpop.permute.xlu0 %660
    %662 = vrot.lane.b32.xlu0 %v428, 72
    %v663 = vpop.permute.xlu0 %662
    %v665 = vsel %vm115, %v661, 0
    %v668 = vsel %vm115, %v663, 0
    %670 = vmatpush.bf16.xpose.msra.mxu0 0
    %671 = vmatpush.bf16.xpose.msra.mxu0 0
    %672 = vmatpush.bf16.xpose.msra.mxu0 0
    %673 = vmatpush.bf16.xpose.msra.mxu0 0
    %674 = vmatpush.bf16.xpose.msra.mxu0 0
    %675 = vmatpush.bf16.xpose.msra.mxu0 0
    %676 = vmatpush.bf16.xpose.msra.mxu0 0
    %677 = vmatpush.bf16.xpose.msra.mxu0 %v668
    %678 = vmatmul.bf16.gmra.mxu0 %v665
    %v679 = vpop.f32.mrf.mxu0
    %v680 = vadd.f32 0.0, %v679
    %v681 = vpop.f32.mrf.mxu0
    %682 = vdwg.mxu0
    %v683 = vsel %vm115, %v680, -inf
    %684 = vmax.xlane.f32.xlu0 %v683
    %v685 = vpop.xlane.xlu0 %684
    %v686 = vsub.f32 %v680, %v685
    %v687 = vmul.f32 %v686, 1.442695
    %v688 = vpow.pop %v687
    %v689 = vsel %vm115, %v688, 0.0
    %690 = vadd.xlane.f32.xlu0 %v689
    %v691 = vpop.xlane.xlu0 %690
    %v692 = vrcp.pop %v691
    %v693 = vmul.f32 %v688, %v692
    %v694 = vpack.c.bf16 %v693, %v693
    %695 = vrot.lane.b32.xlu0 %v428, 40
    %v696 = vpop.permute.xlu0 %695
    %v698 = vsel %vm115, %v694, 0
    %v701 = vsel %vm152, %v696, 0
    %703 = vmatpush.bf16.msra.mxu0 0
    %704 = vmatpush.bf16.msra.mxu0 0
    %705 = vmatpush.bf16.msra.mxu0 0
    %706 = vmatpush.bf16.msra.mxu0 0
    %707 = vmatpush.bf16.msra.mxu0 0
    %708 = vmatpush.bf16.msra.mxu0 0
    %709 = vmatpush.bf16.msra.mxu0 0
    %710 = vmatpush.bf16.msra.mxu0 %v701
    %711 = vmatmul.bf16.gmra.mxu0 %v698
    %v712 = vpop.f32.mrf.mxu0
    %v713 = vadd.f32 0.0, %v712
    %v714 = vpop.f32.mrf.mxu0
    %715 = vdwg.mxu0
    %v716 = vpack.c.bf16 %v713, %v713
    %v717 = vld [vmem:[#allocation7 + $0xc] sm:$0xf]
    %v719 = vsel %vm115, %v716, 0
    %v722 = vsel %vm152, %v717, 0
    %724 = vmatpush.bf16.msra.mxu0 0
    %725 = vmatpush.bf16.msra.mxu0 0
    %726 = vmatpush.bf16.msra.mxu0 0
    %727 = vmatpush.bf16.msra.mxu0 0
    %728 = vmatpush.bf16.msra.mxu0 0
    %729 = vmatpush.bf16.msra.mxu0 0
    %730 = vmatpush.bf16.msra.mxu0 0
    %731 = vmatpush.bf16.msra.mxu0 %v722
    %732 = vmatmul.bf16.gmra.mxu0 %v719
    %v733 = vpop.f32.mrf.mxu0
    %v734 = vadd.f32 0.0, %v733
    %v735 = vpop.f32.mrf.mxu0
    %736 = vdwg.mxu0
    %v737 = vadd.f32 %v659, %v734
    %v738 = vadd.f32 %v737, %v424
    %739 = vst.msk [vmem:[#allocation8 + $0x8] sm:$0xff] %vm92, %v738
    // Predicated region
    $region34: #{tpu_custom_call.1} parent=1 // pred_check
      _
    $region35: #{tpu_custom_call.1} parent=1 // pred_check_branch
      %741 = sbr.rel (0) target = $region37
    $region36: #{tpu_custom_call.1} parent=1 // pred_region
      %743 = vsyncadd [#allocation4], 0
      %s744 = sshll.u32 [#allocation8], 4
      %s745 = int_to_ptr.vmem [resolvable:$true] %s744
      %s746 = sshll.u32 %s5, 4
      %s747 = int_to_ptr.hbm [resolvable:$true] %s746
      %752 = dma.vmem_to_hbm [thread:$0]  %s745, 256, %s747, [#allocation4], 128, 128, 8
    $region37: #{tpu_custom_call.1} parent=1 // pred_fallthru
      _
    // Predicated region
    $region38: #{tpu_custom_call.1} parent=1 // pred_check
      _
    $region39: #{tpu_custom_call.1} parent=1 // pred_check_branch
      %754 = sbr.rel (0) target = $region41
    $region40: #{tpu_custom_call.1} parent=1 // pred_region
      %756 = dma.done [#allocation4], 256
    $region41: #{tpu_custom_call.1} parent=1 // pred_fallthru
      _
    %757 = vsyncpa [#allocation3], 1
    %758 = vsyncpa [#allocation6], 1
    %759 = vsyncpa [#allocation4], 1

</llo_original>
